<compile_context>
chip_gen: v7x
topology: tpu7x:2x2x1
jax: 0.10.0
libtpu: 0.0.40
codegen_flags: <defaults>
</compile_context>

<pallas_src>
import jax
import jax.numpy as jnp
import numpy as np
from jax.experimental import pallas as pl
from jax.experimental.pallas import tpu as pltpu


def _round_up(n, m):
    return -(-n // m) * m


def _discriminator_kernel(x_ref, lb_ref, w1_ref, w2_ref, b2_ref,
                          w3_ref, b3_ref, out_ref):
    """One batch tile: 2 MXU layers + VPU/XLU head, all f32 accumulation."""
    # ---- Layer 1: cast the f32 image tile to bf16 in VMEM, one MXU matmul.
    # Label one-hot contribution and b1 arrive pre-folded per row in lb_ref.
    h = jnp.dot(x_ref[...].astype(jnp.bfloat16), w1_ref[...],
                preferred_element_type=jnp.float32)
    h = h + lb_ref[...]
    h = jnp.maximum(h, 0.2 * h)                                # LeakyReLU(0.2)

    # ---- Layer 2 (bf16 MXU inputs, f32 accumulate).
    h = jnp.dot(h.astype(jnp.bfloat16), w2_ref[...],
                preferred_element_type=jnp.float32) + b2_ref[...]
    h = jnp.maximum(h, 0.2 * h)                                # LeakyReLU(0.2)

    # ---- Layer 3 (out_features == 1): VPU multiply + lane reduce instead of
    # a 1-column MXU matmul.  w3_ref is the weight row (1, H2).
    logit = jnp.sum(h * w3_ref[...], axis=-1, keepdims=True) + b3_ref[...]
    out_ref[...] = 1.0 / (1.0 + jnp.exp(-logit))               # sigmoid (exp on EUP)


def discriminator_forward(x_img, label_onehot, params, *, block_b=256):
    """x_img: (B, C, H, W) float32; label_onehot: (B, num_class) float32."""
    B = x_img.shape[0]
    x_flat = x_img.reshape(B, -1).astype(jnp.float32)
    f_img = x_flat.shape[1]

    w1, b1, w2, b2, w3, b3 = params
    h1 = w1.shape[1]
    h2 = w2.shape[1]

    # Fold the one-hot label's layer-1 contribution and b1 into a per-row bias
    # in the wrapper (tiny B x num_class x h1 op); removes the lane-sparse
    # K=10 matmul and the b1 add from the kernel.
    lbl_bias = label_onehot.astype(jnp.float32) @ w1[f_img:].astype(jnp.float32)
    lbl_bias = lbl_bias + b1                                    # (B, h1) f32

    w1_img = w1[:f_img].astype(jnp.bfloat16)                    # (f_img, h1)
    w2_bf = w2.astype(jnp.bfloat16)                             # (h1, h2)
    w3_row = w3.reshape(1, h2).astype(jnp.float32)              # (1, h2)

    # ---- Batch tile sized to the actual batch (16-row granularity). --------
    # B <= 16: one minimal tile.  Mid-size B: two tiles so the "parallel"
    # batch axis can shard across both v7x TensorCores.  Large B: tm=block_b.
    if B <= 16:
        tm = 16
    elif B <= 2 * block_b:
        tm = _round_up(-(-B // 2), 16)
    else:
        tm = block_b
    num_tiles = -(-B // tm)
    b_pad = num_tiles * tm
    pad = b_pad - B

    x_p = jnp.pad(x_flat, ((0, pad), (0, 0)))                   # f32, cast in-kernel
    lb_p = jnp.pad(lbl_bias, ((0, pad), (0, 0)))                # f32

    grid_spec = pltpu.PrefetchScalarGridSpec(
        num_scalar_prefetch=0,
        grid=(num_tiles,),
        in_specs=[
            pl.BlockSpec((tm, f_img), lambda i: (i, 0)),        # image tile (f32)
            pl.BlockSpec((tm, h1),    lambda i: (i, 0)),        # label bias + b1 tile
            pl.BlockSpec((f_img, h1), lambda i: (0, 0)),        # W1 (image rows), resident
            pl.BlockSpec((h1, h2),    lambda i: (0, 0)),        # W2, resident
            pl.BlockSpec((1, h2),     lambda i: (0, 0)),        # b2
            pl.BlockSpec((1, h2),     lambda i: (0, 0)),        # W3 row
            pl.BlockSpec((1, 1),      lambda i: (0, 0)),        # b3
        ],
        out_specs=pl.BlockSpec((tm, 1), lambda i: (i, 0)),
    )

    flops = 2 * b_pad * (f_img * h1 + h1 * h2 + h2)
    bytes_accessed = int(
        x_p.size * 4 + lb_p.size * 4
        + (w1_img.size + w2_bf.size) * 2
        + (b2.size + w3_row.size + b3.size) * 4
        + b_pad * 4
    )
    cost = pl.CostEstimate(flops=int(flops),
                           transcendentals=int(b_pad),
                           bytes_accessed=bytes_accessed)

    out = pl.pallas_call(
        _discriminator_kernel,
        out_shape=jax.ShapeDtypeStruct((b_pad, 1), jnp.float32),
        grid_spec=grid_spec,
        compiler_params=pltpu.CompilerParams(
            dimension_semantics=("parallel",),          # megacore shard on v7x
            vmem_limit_bytes=48 * 1024 * 1024,          # headroom for v7x's 64 MiB
        ),
        cost_estimate=cost,
    )(x_p, lb_p, w1_img, w2_bf, b2, w3_row, b3)

    return out[:B]


def init_params(key, in_feat, d_dims=(512, 256)):
    """Deterministic PyTorch-style Linear init: U(-1/sqrt(fan_in), 1/sqrt(fan_in))."""
    dims = [in_feat, *d_dims, 1]
    params = []
    for i in range(len(dims) - 1):
        fan_in, fan_out = dims[i], dims[i + 1]
        key, kw, kb = jax.random.split(key, 3)
        bound = 1.0 / np.sqrt(fan_in)
        w = jax.random.uniform(kw, (fan_in, fan_out), jnp.float32, -bound, bound)
        b = jax.random.uniform(kb, (1, fan_out), jnp.float32, -bound, bound)
        params += [w, b]
    return tuple(params)


if __name__ == "__main__":
    # Small, module-consistent shapes: img_shape=(1, 16, 16), num_class=10, batch=4.
    img_shape = (1, 16, 16)
    num_class = 10
    batch = 4
    d_dims = (512, 256)

    key = jax.random.PRNGKey(0)
    k_img, k_lbl, k_par = jax.random.split(key, 3)

    x = jax.random.normal(k_img, (batch,) + img_shape, dtype=jnp.float32)
    labels = jax.random.randint(k_lbl, (batch,), 0, num_class)
    label_onehot = jax.nn.one_hot(labels, num_class, dtype=jnp.float32)

    in_feat = int(np.prod(img_shape)) + num_class
    params = init_params(k_par, in_feat, d_dims)

    pred = discriminator_forward(x, label_onehot, params)
    pred = jax.block_until_ready(pred)

    assert pred.shape == (batch, 1)
    assert bool(jnp.all((pred >= 0.0) & (pred <= 1.0)))
    print("KERNEL_OK")
</pallas_src>

<mosaic_0001>
module attributes {stable_mosaic.version = 11 : i64} {
  func.func @_discriminator_kernel(%arg0: i32, %arg1: memref<16x256xf32, #tpu.memory_space<vmem>>, %arg2: memref<16x512xf32, #tpu.memory_space<vmem>>, %arg3: memref<256x512xbf16, #tpu.memory_space<vmem>>, %arg4: memref<512x256xbf16, #tpu.memory_space<vmem>>, %arg5: memref<1x256xf32, #tpu.memory_space<vmem>>, %arg6: memref<1x256xf32, #tpu.memory_space<vmem>>, %arg7: memref<1x1xf32, #tpu.memory_space<vmem>>, %arg8: memref<16x1xf32, #tpu.memory_space<vmem>>) attributes {dimension_semantics = [#tpu.dimension_semantics<parallel>], iteration_bounds = array<i64: 1>, scalar_prefetch = 0 : i64, scratch_operands = 0 : i64, tpu.core_type = #tpu.core_type<tc>, window_params = [{transform_indices = @transform_0, window_bounds = array<i64: 16, 256>}, {transform_indices = @transform_1, window_bounds = array<i64: 16, 512>}, {pipeline_mode = #tpu.pipeline_mode<synchronous>, transform_indices = @transform_2, window_bounds = array<i64: 256, 512>}, {pipeline_mode = #tpu.pipeline_mode<synchronous>, transform_indices = @transform_3, window_bounds = array<i64: 512, 256>}, {pipeline_mode = #tpu.pipeline_mode<synchronous>, transform_indices = @transform_4, window_bounds = array<i64: 1, 256>}, {pipeline_mode = #tpu.pipeline_mode<synchronous>, transform_indices = @transform_5, window_bounds = array<i64: 1, 256>}, {pipeline_mode = #tpu.pipeline_mode<synchronous>, transform_indices = @transform_6, window_bounds = array<i64: 1, 1>}, {transform_indices = @transform_7, window_bounds = array<i64: 16, 1>}]} {
    %c0 = arith.constant 0 : index
    %c0_0 = arith.constant 0 : index
    %0 = vector.load %arg1[%c0, %c0_0] : memref<16x256xf32, #tpu.memory_space<vmem>>, vector<16x256xf32>
    %1 = arith.truncf %0 : vector<16x256xf32> to vector<16x256xbf16>
    %c0_1 = arith.constant 0 : index
    %c0_2 = arith.constant 0 : index
    %2 = vector.load %arg3[%c0_1, %c0_2] : memref<256x512xbf16, #tpu.memory_space<vmem>>, vector<256x512xbf16>
    %cst = arith.constant dense<0.000000e+00> : vector<16x512xf32>
    %3 = tpu.matmul %1, %2, %cst {dimension_numbers = #tpu.dot_dimension_numbers<[1], [0], [0], [1], [0, 0, 1, 1], [], []>} : vector<16x256xbf16>, vector<256x512xbf16>, vector<16x512xf32> -> vector<16x512xf32>
    %c0_3 = arith.constant 0 : index
    %c0_4 = arith.constant 0 : index
    %4 = vector.load %arg2[%c0_3, %c0_4] : memref<16x512xf32, #tpu.memory_space<vmem>>, vector<16x512xf32>
    %5 = arith.addf %3, %4 : vector<16x512xf32>
    %cst_5 = arith.constant 2.000000e-01 : f32
    %6 = vector.broadcast %cst_5 : f32 to vector<16x512xf32>
    %7 = arith.mulf %6, %5 : vector<16x512xf32>
    %8 = arith.maximumf %5, %7 : vector<16x512xf32>
    %9 = arith.truncf %8 : vector<16x512xf32> to vector<16x512xbf16>
    %c0_6 = arith.constant 0 : index
    %c0_7 = arith.constant 0 : index
    %10 = vector.load %arg4[%c0_6, %c0_7] : memref<512x256xbf16, #tpu.memory_space<vmem>>, vector<512x256xbf16>
    %cst_8 = arith.constant dense<0.000000e+00> : vector<16x256xf32>
    %11 = tpu.matmul %9, %10, %cst_8 {dimension_numbers = #tpu.dot_dimension_numbers<[1], [0], [0], [1], [0, 0, 1, 1], [], []>} : vector<16x512xbf16>, vector<512x256xbf16>, vector<16x256xf32> -> vector<16x256xf32>
    %c0_9 = arith.constant 0 : index
    %c0_10 = arith.constant 0 : index
    %12 = vector.load %arg5[%c0_9, %c0_10] : memref<1x256xf32, #tpu.memory_space<vmem>>, vector<1x256xf32>
    %13 = vector.broadcast %12 : vector<1x256xf32> to vector<16x256xf32>
    %14 = arith.addf %11, %13 : vector<16x256xf32>
    %cst_11 = arith.constant 2.000000e-01 : f32
    %15 = vector.broadcast %cst_11 : f32 to vector<16x256xf32>
    %16 = arith.mulf %15, %14 : vector<16x256xf32>
    %17 = arith.maximumf %14, %16 : vector<16x256xf32>
    %c0_12 = arith.constant 0 : index
    %c0_13 = arith.constant 0 : index
    %18 = vector.load %arg6[%c0_12, %c0_13] : memref<1x256xf32, #tpu.memory_space<vmem>>, vector<1x256xf32>
    %19 = vector.broadcast %18 : vector<1x256xf32> to vector<16x256xf32>
    %20 = arith.mulf %17, %19 : vector<16x256xf32>
    %cst_14 = arith.constant dense<0.000000e+00> : vector<16xf32>
    %21 = vector.multi_reduction <add>, %20, %cst_14 [1] : vector<16x256xf32> to vector<16xf32>
    %22 = vector.shape_cast %21 : vector<16xf32> to vector<16x1xf32>
    %c0_15 = arith.constant 0 : index
    %c0_16 = arith.constant 0 : index
    %23 = vector.load %arg7[%c0_15, %c0_16] : memref<1x1xf32, #tpu.memory_space<vmem>>, vector<1x1xf32>
    %24 = vector.broadcast %23 : vector<1x1xf32> to vector<16x1xf32>
    %25 = arith.addf %22, %24 : vector<16x1xf32>
    %cst_17 = arith.constant 0.000000e+00 : f32
    %26 = vector.broadcast %cst_17 : f32 to vector<16x1xf32>
    %27 = arith.subf %26, %25 : vector<16x1xf32>
    %28 = math.exp %27 : vector<16x1xf32>
    %cst_18 = arith.constant 1.000000e+00 : f32
    %29 = vector.broadcast %cst_18 : f32 to vector<16x1xf32>
    %30 = arith.addf %29, %28 : vector<16x1xf32>
    %cst_19 = arith.constant 1.000000e+00 : f32
    %31 = vector.broadcast %cst_19 : f32 to vector<16x1xf32>
    %32 = arith.divf %31, %30 : vector<16x1xf32>
    %c0_20 = arith.constant 0 : index
    %c0_21 = arith.constant 0 : index
    %33 = vector.load %arg8[%c0_20, %c0_21] : memref<16x1xf32, #tpu.memory_space<vmem>>, vector<16x1xf32>
    tpu.vector_store %arg8[%c0_20, %c0_21], %32 {strides = array<i32>} : memref<16x1xf32, #tpu.memory_space<vmem>>, vector<16x1xf32>,
    return
  }
  func.func @transform_0(%arg0: i32) -> (i32, i32) {
    %c0_i32 = arith.constant 0 : i32
    %c0_i32_0 = arith.constant 0 : i32
    return %arg0, %c0_i32 : i32, i32
  }
  func.func @transform_1(%arg0: i32) -> (i32, i32) {
    %c0_i32 = arith.constant 0 : i32
    %c0_i32_0 = arith.constant 0 : i32
    return %arg0, %c0_i32 : i32, i32
  }
  func.func @transform_2(%arg0: i32) -> (i32, i32) {
    %c0_i32 = arith.constant 0 : i32
    %c0_i32_0 = arith.constant 0 : i32
    %c0_i32_1 = arith.constant 0 : i32
    return %c0_i32, %c0_i32_0 : i32, i32
  }
  func.func @transform_3(%arg0: i32) -> (i32, i32) {
    %c0_i32 = arith.constant 0 : i32
    %c0_i32_0 = arith.constant 0 : i32
    %c0_i32_1 = arith.constant 0 : i32
    return %c0_i32, %c0_i32_0 : i32, i32
  }
  func.func @transform_4(%arg0: i32) -> (i32, i32) {
    %c0_i32 = arith.constant 0 : i32
    %c0_i32_0 = arith.constant 0 : i32
    %c0_i32_1 = arith.constant 0 : i32
    return %c0_i32, %c0_i32_0 : i32, i32
  }
  func.func @transform_5(%arg0: i32) -> (i32, i32) {
    %c0_i32 = arith.constant 0 : i32
    %c0_i32_0 = arith.constant 0 : i32
    %c0_i32_1 = arith.constant 0 : i32
    return %c0_i32, %c0_i32_0 : i32, i32
  }
  func.func @transform_6(%arg0: i32) -> (i32, i32) {
    %c0_i32 = arith.constant 0 : i32
    %c0_i32_0 = arith.constant 0 : i32
    %c0_i32_1 = arith.constant 0 : i32
    return %c0_i32, %c0_i32_0 : i32, i32
  }
  func.func @transform_7(%arg0: i32) -> (i32, i32) {
    %c0_i32 = arith.constant 0 : i32
    %c0_i32_0 = arith.constant 0 : i32
    return %arg0, %c0_i32 : i32, i32
  }
}

</mosaic_0001>

<llo_original>
// kernel: tpu_custom_call.1
$region0: #{tpu_custom_call.1}
  #allocation0 [shape = 'u32[]', space=smem, size = 0x4, offset = 0x4, fixed_abs, tag = 'smem constant byte address 0x4 - core index']
  #allocation1 [shape = 'u32[144,128]{1,0:T(1,128)}', space=vmem, size = 0x12000, scoped, tag = 'internal scratch']
  #allocation2 [shape = 'f32[1,1]{1,0:T(1,128)S(1)}', space=vmem, size = 0x200, scoped, tag = 'scoped memory for tpu_custom_call.1']
  %s0 = inlined_call_operand.hbm [shape: f32[16,256], index: 0, kind: input, shape index: {}]
  %s1 = inlined_call_operand.hbm [shape: f32[16,512], index: 1, kind: input, shape index: {}]
  %s2 = inlined_call_operand.hbm [shape: bf16[256,512], index: 2, kind: input, shape index: {}]
  %s3 = inlined_call_operand.hbm [shape: bf16[512,256], index: 3, kind: input, shape index: {}]
  %s4 = inlined_call_operand.vmem [shape: f32[1,256], index: 4, kind: input, shape index: {}]
  %s5 = inlined_call_operand.vmem [shape: f32[1,256], index: 5, kind: input, shape index: {}]
  %s6 = inlined_call_operand.<no memory space> [shape: f32[1,1], index: 6, kind: input, shape index: {}]
  %s7 = inlined_call_operand.vmem [shape: f32[16,1], index: 7, kind: output, shape index: {}]
  %s8 = sld [smem:[#allocation0]]
  $region54: #{tpu_custom_call.1} parent=0
    _
  %s10 = ssub.s32 1, %s8
  %s11 = scalar_select 0, %s10, %s8
  %v12 = vstv %s6
  %13 = vst [vmem:[#allocation2] sm:$0x1] %v12
  $region1: #{tpu_custom_call.1} parent=0
    #allocation3 [shape = 'u8[16384]{0}', space=vmem, size = 0x4000, scoped, tag = 'input window, operand 0, single buffered']
    #allocation4 [shape = 's32[1]{0}', space=sflag, size = 0x4, scoped, tag = 'scoped memory for tpu_custom_call.1']
    #allocation5 [shape = 'u8[32768]{0}', space=vmem, size = 0x8000, scoped, tag = 'input window, operand 1, single buffered']
    #allocation6 [shape = 's32[1]{0}', space=sflag, size = 0x4, scoped, tag = 'scoped memory for tpu_custom_call.1']
    #allocation7 [shape = 'u8[262144]{0}', space=vmem, size = 0x40000, scoped, tag = 'input window, operand 2, single buffered']
    #allocation8 [shape = 'u8[262144]{0}', space=vmem, size = 0x40000, scoped, tag = 'input window, operand 3, single buffered']
    #allocation9 [shape = 's32[1]{0}', space=sflag, size = 0x4, scoped, tag = 'scoped memory for tpu_custom_call.1']
    %14 = vsyncpa [#allocation4], 0
    %15 = vsyncpa [#allocation6], 0
    %16 = vsyncpa [#allocation9], 0
    // Predicated region
    $region2: #{tpu_custom_call.1} parent=1 // pred_check
      _
    $region3: #{tpu_custom_call.1} parent=1 // pred_check_branch
      %18 = sbr.rel (0) target = $region5
    $region4: #{tpu_custom_call.1} parent=1 // pred_region
      %s20 = ssub.s32 512, 512
      %21 = vsyncadd [#allocation4], %s20
      %s22 = sshll.u32 [#allocation3], 4
      %s23 = int_to_ptr.vmem [resolvable:$true] %s22
      %28 = dma.hbm_to_vmem [thread:$0]  %s0, 512, %s23, [#allocation4], 256, 256, 16
    $region5: #{tpu_custom_call.1} parent=1 // pred_fallthru
      _
    // Predicated region
    $region6: #{tpu_custom_call.1} parent=1 // pred_check
      _
    $region7: #{tpu_custom_call.1} parent=1 // pred_check_branch
      %30 = sbr.rel (0) target = $region9
    $region8: #{tpu_custom_call.1} parent=1 // pred_region
      %s32 = ssub.s32 1024, 1024
      %33 = vsyncadd [#allocation6], %s32
      %s34 = sshll.u32 [#allocation5], 4
      %s35 = int_to_ptr.vmem [resolvable:$true] %s34
      %40 = dma.hbm_to_vmem [thread:$0]  %s1, 1024, %s35, [#allocation6], 512, 512, 32
    $region9: #{tpu_custom_call.1} parent=1 // pred_fallthru
      _
    // Predicated region
    $region10: #{tpu_custom_call.1} parent=1 // pred_check
      _
    $region11: #{tpu_custom_call.1} parent=1 // pred_check_branch
      %42 = sbr.rel (0) target = $region13
    $region12: #{tpu_custom_call.1} parent=1 // pred_region
      %s44 = ssub.s32 8192, 8192
      %45 = vsyncadd [#allocation6], %s44
      %s46 = sshll.u32 [#allocation7], 4
      %s47 = int_to_ptr.vmem [resolvable:$true] %s46
      %52 = dma.hbm_to_vmem [thread:$0]  %s2, 8192, %s47, [#allocation6], 256, 256, 16
    $region13: #{tpu_custom_call.1} parent=1 // pred_fallthru
      _
    // Predicated region
    $region14: #{tpu_custom_call.1} parent=1 // pred_check
      _
    $region15: #{tpu_custom_call.1} parent=1 // pred_check_branch
      %54 = sbr.rel (0) target = $region17
    $region16: #{tpu_custom_call.1} parent=1 // pred_region
      %s56 = ssub.s32 8192, 8192
      %57 = vsyncadd [#allocation9], %s56
      %s58 = sshll.u32 [#allocation8], 4
      %s59 = int_to_ptr.vmem [resolvable:$true] %s58
      %64 = dma.hbm_to_vmem [thread:$0]  %s3, 8192, %s59, [#allocation9], 128, 128, 8
    $region17: #{tpu_custom_call.1} parent=1 // pred_fallthru
      _
    // Predicated region
    $region18: #{tpu_custom_call.1} parent=1 // pred_check
      _
    $region19: #{tpu_custom_call.1} parent=1 // pred_check_branch
      %66 = sbr.rel (0) target = $region21
    $region20: #{tpu_custom_call.1} parent=1 // pred_region
      _
    $region21: #{tpu_custom_call.1} parent=1 // pred_fallthru
      _
    // Predicated region
    $region22: #{tpu_custom_call.1} parent=1 // pred_check
      _
    $region23: #{tpu_custom_call.1} parent=1 // pred_check_branch
      %68 = sbr.rel (0) target = $region25
    $region24: #{tpu_custom_call.1} parent=1 // pred_region
      _
    $region25: #{tpu_custom_call.1} parent=1 // pred_fallthru
      _
    // Predicated region
    $region26: #{tpu_custom_call.1} parent=1 // pred_check
      _
    $region27: #{tpu_custom_call.1} parent=1 // pred_check_branch
      %70 = sbr.rel (0) target = $region29
    $region28: #{tpu_custom_call.1} parent=1 // pred_region
      _
    $region29: #{tpu_custom_call.1} parent=1 // pred_fallthru
      _
    // Predicated region
    $region30: #{tpu_custom_call.1} parent=1 // pred_check
      _
    $region31: #{tpu_custom_call.1} parent=1 // pred_check_branch
      %72 = sbr.rel (0) target = $region33
    $region32: #{tpu_custom_call.1} parent=1 // pred_region
      %73 = dma.done [#allocation4], 512
    $region33: #{tpu_custom_call.1} parent=1 // pred_fallthru
      _
    // Predicated region
    $region34: #{tpu_custom_call.1} parent=1 // pred_check
      _
    $region35: #{tpu_custom_call.1} parent=1 // pred_check_branch
      %75 = sbr.rel (0) target = $region37
    $region36: #{tpu_custom_call.1} parent=1 // pred_region
      %76 = dma.done [#allocation6], 1024
    $region37: #{tpu_custom_call.1} parent=1 // pred_fallthru
      _
    // Predicated region
    $region38: #{tpu_custom_call.1} parent=1 // pred_check
      _
    $region39: #{tpu_custom_call.1} parent=1 // pred_check_branch
      %78 = sbr.rel (0) target = $region41
    $region40: #{tpu_custom_call.1} parent=1 // pred_region
      %79 = dma.done [#allocation6], 8192
    $region41: #{tpu_custom_call.1} parent=1 // pred_fallthru
      _
    // Predicated region
    $region42: #{tpu_custom_call.1} parent=1 // pred_check
      _
    $region43: #{tpu_custom_call.1} parent=1 // pred_check_branch
      %81 = sbr.rel (0) target = $region45
    $region44: #{tpu_custom_call.1} parent=1 // pred_region
      %82 = dma.done [#allocation9], 8192
    $region45: #{tpu_custom_call.1} parent=1 // pred_fallthru
      _
    %v83 = vld [vmem:[#allocation3] sm:$0xff]
    %v84 = vld [vmem:[#allocation3 + $0x8] sm:$0xff]
    %v85 = vld [vmem:[#allocation3 + $0x10] sm:$0xff]
    %v86 = vld [vmem:[#allocation3 + $0x18] sm:$0xff]
    %v87 = vpack.c.bf16 %v85, %v83
    %v88 = vpack.c.bf16 %v86, %v84
    %v89 = vld [vmem:[#allocation7] sm:$0xff]
    %v90 = vld [vmem:[#allocation7 + $0x8] sm:$0xff]
    %v91 = vld [vmem:[#allocation7 + $0x10] sm:$0xff]
    %v92 = vld [vmem:[#allocation7 + $0x18] sm:$0xff]
    %v93 = vld [vmem:[#allocation7 + $0x20] sm:$0xff]
    %v94 = vld [vmem:[#allocation7 + $0x28] sm:$0xff]
    %v95 = vld [vmem:[#allocation7 + $0x30] sm:$0xff]
    %v96 = vld [vmem:[#allocation7 + $0x38] sm:$0xff]
    %v97 = vld [vmem:[#allocation7 + $0x40] sm:$0xff]
    %v98 = vld [vmem:[#allocation7 + $0x48] sm:$0xff]
    %v99 = vld [vmem:[#allocation7 + $0x50] sm:$0xff]
    %v100 = vld [vmem:[#allocation7 + $0x58] sm:$0xff]
    %v101 = vld [vmem:[#allocation7 + $0x60] sm:$0xff]
    %v102 = vld [vmem:[#allocation7 + $0x68] sm:$0xff]
    %v103 = vld [vmem:[#allocation7 + $0x70] sm:$0xff]
    %v104 = vld [vmem:[#allocation7 + $0x78] sm:$0xff]
    %v105 = vld [vmem:[#allocation7 + $0x80] sm:$0xff]
    %v106 = vld [vmem:[#allocation7 + $0x88] sm:$0xff]
    %v107 = vld [vmem:[#allocation7 + $0x90] sm:$0xff]
    %v108 = vld [vmem:[#allocation7 + $0x98] sm:$0xff]
    %v109 = vld [vmem:[#allocation7 + $0xa0] sm:$0xff]
    %v110 = vld [vmem:[#allocation7 + $0xa8] sm:$0xff]
    %v111 = vld [vmem:[#allocation7 + $0xb0] sm:$0xff]
    %v112 = vld [vmem:[#allocation7 + $0xb8] sm:$0xff]
    %v113 = vld [vmem:[#allocation7 + $0xc0] sm:$0xff]
    %v114 = vld [vmem:[#allocation7 + $0xc8] sm:$0xff]
    %v115 = vld [vmem:[#allocation7 + $0xd0] sm:$0xff]
    %v116 = vld [vmem:[#allocation7 + $0xd8] sm:$0xff]
    %v117 = vld [vmem:[#allocation7 + $0xe0] sm:$0xff]
    %v118 = vld [vmem:[#allocation7 + $0xe8] sm:$0xff]
    %v119 = vld [vmem:[#allocation7 + $0xf0] sm:$0xff]
    %v120 = vld [vmem:[#allocation7 + $0xf8] sm:$0xff]
    %v121 = vld [vmem:[#allocation7 + $0x100] sm:$0xff]
    %v122 = vld [vmem:[#allocation7 + $0x108] sm:$0xff]
    %v123 = vld [vmem:[#allocation7 + $0x110] sm:$0xff]
    %v124 = vld [vmem:[#allocation7 + $0x118] sm:$0xff]
    %v125 = vld [vmem:[#allocation7 + $0x120] sm:$0xff]
    %v126 = vld [vmem:[#allocation7 + $0x128] sm:$0xff]
    %v127 = vld [vmem:[#allocation7 + $0x130] sm:$0xff]
    %v128 = vld [vmem:[#allocation7 + $0x138] sm:$0xff]
    %v129 = vld [vmem:[#allocation7 + $0x140] sm:$0xff]
    %v130 = vld [vmem:[#allocation7 + $0x148] sm:$0xff]
    %v131 = vld [vmem:[#allocation7 + $0x150] sm:$0xff]
    %v132 = vld [vmem:[#allocation7 + $0x158] sm:$0xff]
    %v133 = vld [vmem:[#allocation7 + $0x160] sm:$0xff]
    %v134 = vld [vmem:[#allocation7 + $0x168] sm:$0xff]
    %v135 = vld [vmem:[#allocation7 + $0x170] sm:$0xff]
    %v136 = vld [vmem:[#allocation7 + $0x178] sm:$0xff]
    %v137 = vld [vmem:[#allocation7 + $0x180] sm:$0xff]
    %v138 = vld [vmem:[#allocation7 + $0x188] sm:$0xff]
    %v139 = vld [vmem:[#allocation7 + $0x190] sm:$0xff]
    %v140 = vld [vmem:[#allocation7 + $0x198] sm:$0xff]
    %v141 = vld [vmem:[#allocation7 + $0x1a0] sm:$0xff]
    %v142 = vld [vmem:[#allocation7 + $0x1a8] sm:$0xff]
    %v143 = vld [vmem:[#allocation7 + $0x1b0] sm:$0xff]
    %v144 = vld [vmem:[#allocation7 + $0x1b8] sm:$0xff]
    %v145 = vld [vmem:[#allocation7 + $0x1c0] sm:$0xff]
    %v146 = vld [vmem:[#allocation7 + $0x1c8] sm:$0xff]
    %v147 = vld [vmem:[#allocation7 + $0x1d0] sm:$0xff]
    %v148 = vld [vmem:[#allocation7 + $0x1d8] sm:$0xff]
    %v149 = vld [vmem:[#allocation7 + $0x1e0] sm:$0xff]
    %v150 = vld [vmem:[#allocation7 + $0x1e8] sm:$0xff]
    %v151 = vld [vmem:[#allocation7 + $0x1f0] sm:$0xff]
    %v152 = vld [vmem:[#allocation7 + $0x1f8] sm:$0xff]
    %v153 = vld [vmem:[#allocation5] sm:$0xff]
    %v154 = vld [vmem:[#allocation5 + $0x8] sm:$0xff]
    %v155 = vld [vmem:[#allocation5 + $0x10] sm:$0xff]
    %v156 = vld [vmem:[#allocation5 + $0x18] sm:$0xff]
    %v157 = vld [vmem:[#allocation5 + $0x20] sm:$0xff]
    %v158 = vld [vmem:[#allocation5 + $0x28] sm:$0xff]
    %v159 = vld [vmem:[#allocation5 + $0x30] sm:$0xff]
    %v160 = vld [vmem:[#allocation5 + $0x38] sm:$0xff]
    %v225 = vunpack.c.l.b16 %v89
    %v226 = vunpack.c.h.b16 %v89
    %v227 = vunpack.c.l.b16 %v90
    %v228 = vunpack.c.h.b16 %v90
    %v229 = vunpack.c.l.b16 %v91
    %v230 = vunpack.c.h.b16 %v91
    %v231 = vunpack.c.l.b16 %v92
    %v232 = vunpack.c.h.b16 %v92
    %v233 = vunpack.c.l.b16 %v93
    %v234 = vunpack.c.h.b16 %v93
    %v235 = vunpack.c.l.b16 %v94
    %v236 = vunpack.c.h.b16 %v94
    %v237 = vunpack.c.l.b16 %v95
    %v238 = vunpack.c.h.b16 %v95
    %v239 = vunpack.c.l.b16 %v96
    %v240 = vunpack.c.h.b16 %v96
    %v241 = vunpack.c.l.b16 %v97
    %v242 = vunpack.c.h.b16 %v97
    %v243 = vunpack.c.l.b16 %v98
    %v244 = vunpack.c.h.b16 %v98
    %v245 = vunpack.c.l.b16 %v99
    %v246 = vunpack.c.h.b16 %v99
    %v247 = vunpack.c.l.b16 %v100
    %v248 = vunpack.c.h.b16 %v100
    %v249 = vunpack.c.l.b16 %v101
    %v250 = vunpack.c.h.b16 %v101
    %v251 = vunpack.c.l.b16 %v102
    %v252 = vunpack.c.h.b16 %v102
    %v253 = vunpack.c.l.b16 %v103
    %v254 = vunpack.c.h.b16 %v103
    %v255 = vunpack.c.l.b16 %v104
    %v256 = vunpack.c.h.b16 %v104
    %v257 = vunpack.c.l.b16 %v105
    %v258 = vunpack.c.h.b16 %v105
    %v259 = vunpack.c.l.b16 %v106
    %v260 = vunpack.c.h.b16 %v106
    %v261 = vunpack.c.l.b16 %v107
    %v262 = vunpack.c.h.b16 %v107
    %v263 = vunpack.c.l.b16 %v108
    %v264 = vunpack.c.h.b16 %v108
    %v265 = vunpack.c.l.b16 %v109
    %v266 = vunpack.c.h.b16 %v109
    %v267 = vunpack.c.l.b16 %v110
    %v268 = vunpack.c.h.b16 %v110
    %v269 = vunpack.c.l.b16 %v111
    %v270 = vunpack.c.h.b16 %v111
    %v271 = vunpack.c.l.b16 %v112
    %v272 = vunpack.c.h.b16 %v112
    %v273 = vunpack.c.l.b16 %v113
    %v274 = vunpack.c.h.b16 %v113
    %v275 = vunpack.c.l.b16 %v114
    %v276 = vunpack.c.h.b16 %v114
    %v277 = vunpack.c.l.b16 %v115
    %v278 = vunpack.c.h.b16 %v115
    %v279 = vunpack.c.l.b16 %v116
    %v280 = vunpack.c.h.b16 %v116
    %v281 = vunpack.c.l.b16 %v117
    %v282 = vunpack.c.h.b16 %v117
    %v283 = vunpack.c.l.b16 %v118
    %v284 = vunpack.c.h.b16 %v118
    %v285 = vunpack.c.l.b16 %v119
    %v286 = vunpack.c.h.b16 %v119
    %v287 = vunpack.c.l.b16 %v120
    %v288 = vunpack.c.h.b16 %v120
    %v289 = vunpack.c.l.b16 %v121
    %v290 = vunpack.c.h.b16 %v121
    %v291 = vunpack.c.l.b16 %v122
    %v292 = vunpack.c.h.b16 %v122
    %v293 = vunpack.c.l.b16 %v123
    %v294 = vunpack.c.h.b16 %v123
    %v295 = vunpack.c.l.b16 %v124
    %v296 = vunpack.c.h.b16 %v124
    %v297 = vunpack.c.l.b16 %v125
    %v298 = vunpack.c.h.b16 %v125
    %v299 = vunpack.c.l.b16 %v126
    %v300 = vunpack.c.h.b16 %v126
    %v301 = vunpack.c.l.b16 %v127
    %v302 = vunpack.c.h.b16 %v127
    %v303 = vunpack.c.l.b16 %v128
    %v304 = vunpack.c.h.b16 %v128
    %v305 = vunpack.c.l.b16 %v129
    %v306 = vunpack.c.h.b16 %v129
    %v307 = vunpack.c.l.b16 %v130
    %v308 = vunpack.c.h.b16 %v130
    %v309 = vunpack.c.l.b16 %v131
    %v310 = vunpack.c.h.b16 %v131
    %v311 = vunpack.c.l.b16 %v132
    %v312 = vunpack.c.h.b16 %v132
    %v313 = vunpack.c.l.b16 %v133
    %v314 = vunpack.c.h.b16 %v133
    %v315 = vunpack.c.l.b16 %v134
    %v316 = vunpack.c.h.b16 %v134
    %v317 = vunpack.c.l.b16 %v135
    %v318 = vunpack.c.h.b16 %v135
    %v319 = vunpack.c.l.b16 %v136
    %v320 = vunpack.c.h.b16 %v136
    %v321 = vunpack.c.l.b16 %v137
    %v322 = vunpack.c.h.b16 %v137
    %v323 = vunpack.c.l.b16 %v138
    %v324 = vunpack.c.h.b16 %v138
    %v325 = vunpack.c.l.b16 %v139
    %v326 = vunpack.c.h.b16 %v139
    %v327 = vunpack.c.l.b16 %v140
    %v328 = vunpack.c.h.b16 %v140
    %v329 = vunpack.c.l.b16 %v141
    %v330 = vunpack.c.h.b16 %v141
    %v331 = vunpack.c.l.b16 %v142
    %v332 = vunpack.c.h.b16 %v142
    %v333 = vunpack.c.l.b16 %v143
    %v334 = vunpack.c.h.b16 %v143
    %v335 = vunpack.c.l.b16 %v144
    %v336 = vunpack.c.h.b16 %v144
    %v337 = vunpack.c.l.b16 %v145
    %v338 = vunpack.c.h.b16 %v145
    %v339 = vunpack.c.l.b16 %v146
    %v340 = vunpack.c.h.b16 %v146
    %v341 = vunpack.c.l.b16 %v147
    %v342 = vunpack.c.h.b16 %v147
    %v343 = vunpack.c.l.b16 %v148
    %v344 = vunpack.c.h.b16 %v148
    %v345 = vunpack.c.l.b16 %v149
    %v346 = vunpack.c.h.b16 %v149
    %v347 = vunpack.c.l.b16 %v150
    %v348 = vunpack.c.h.b16 %v150
    %v349 = vunpack.c.l.b16 %v151
    %v350 = vunpack.c.h.b16 %v151
    %v351 = vunpack.c.l.b16 %v152
    %v352 = vunpack.c.h.b16 %v152
    %v353 = vpack.c.b16 %v229, %v225
    %v354 = vpack.c.b16 %v230, %v226
    %v355 = vpack.c.b16 %v231, %v227
    %v356 = vpack.c.b16 %v232, %v228
    %v357 = vpack.c.b16 %v237, %v233
    %v358 = vpack.c.b16 %v238, %v234
    %v359 = vpack.c.b16 %v239, %v235
    %v360 = vpack.c.b16 %v240, %v236
    %v361 = vpack.c.b16 %v245, %v241
    %v362 = vpack.c.b16 %v246, %v242
    %v363 = vpack.c.b16 %v247, %v243
    %v364 = vpack.c.b16 %v248, %v244
    %v365 = vpack.c.b16 %v253, %v249
    %v366 = vpack.c.b16 %v254, %v250
    %v367 = vpack.c.b16 %v255, %v251
    %v368 = vpack.c.b16 %v256, %v252
    %v369 = vpack.c.b16 %v261, %v257
    %v370 = vpack.c.b16 %v262, %v258
    %v371 = vpack.c.b16 %v263, %v259
    %v372 = vpack.c.b16 %v264, %v260
    %v373 = vpack.c.b16 %v269, %v265
    %v374 = vpack.c.b16 %v270, %v266
    %v375 = vpack.c.b16 %v271, %v267
    %v376 = vpack.c.b16 %v272, %v268
    %v377 = vpack.c.b16 %v277, %v273
    %v378 = vpack.c.b16 %v278, %v274
    %v379 = vpack.c.b16 %v279, %v275
    %v380 = vpack.c.b16 %v280, %v276
    %v381 = vpack.c.b16 %v285, %v281
    %v382 = vpack.c.b16 %v286, %v282
    %v383 = vpack.c.b16 %v287, %v283
    %v384 = vpack.c.b16 %v288, %v284
    %v385 = vpack.c.b16 %v293, %v289
    %v386 = vpack.c.b16 %v294, %v290
    %v387 = vpack.c.b16 %v295, %v291
    %v388 = vpack.c.b16 %v296, %v292
    %v389 = vpack.c.b16 %v301, %v297
    %v390 = vpack.c.b16 %v302, %v298
    %v391 = vpack.c.b16 %v303, %v299
    %v392 = vpack.c.b16 %v304, %v300
    %v393 = vpack.c.b16 %v309, %v305
    %v394 = vpack.c.b16 %v310, %v306
    %v395 = vpack.c.b16 %v311, %v307
    %v396 = vpack.c.b16 %v312, %v308
    %v397 = vpack.c.b16 %v317, %v313
    %v398 = vpack.c.b16 %v318, %v314
    %v399 = vpack.c.b16 %v319, %v315
    %v400 = vpack.c.b16 %v320, %v316
    %v401 = vpack.c.b16 %v325, %v321
    %v402 = vpack.c.b16 %v326, %v322
    %v403 = vpack.c.b16 %v327, %v323
    %v404 = vpack.c.b16 %v328, %v324
    %v405 = vpack.c.b16 %v333, %v329
    %v406 = vpack.c.b16 %v334, %v330
    %v407 = vpack.c.b16 %v335, %v331
    %v408 = vpack.c.b16 %v336, %v332
    %v409 = vpack.c.b16 %v341, %v337
    %v410 = vpack.c.b16 %v342, %v338
    %v411 = vpack.c.b16 %v343, %v339
    %v412 = vpack.c.b16 %v344, %v340
    %v413 = vpack.c.b16 %v349, %v345
    %v414 = vpack.c.b16 %v350, %v346
    %v415 = vpack.c.b16 %v351, %v347
    %v416 = vpack.c.b16 %v352, %v348
    %481 = vmatprep.subr.bf16.mxu0 %v354
    %482 = vmatpush1.bf16.msra.mxu0 %v353
    %483 = vmatprep.subr.bf16.mxu0 %v358
    %484 = vmatpush1.bf16.msra.mxu0 %v357
    %485 = vmatprep.subr.bf16.mxu0 %v362
    %486 = vmatpush1.bf16.msra.mxu0 %v361
    %487 = vmatprep.subr.bf16.mxu0 %v366
    %488 = vmatpush1.bf16.msra.mxu0 %v365
    %489 = vmatprep.subr.bf16.mxu0 %v370
    %490 = vmatpush1.bf16.msra.mxu0 %v369
    %491 = vmatprep.subr.bf16.mxu0 %v374
    %492 = vmatpush1.bf16.msra.mxu0 %v373
    %493 = vmatprep.subr.bf16.mxu0 %v378
    %494 = vmatpush1.bf16.msra.mxu0 %v377
    %495 = vmatprep.subr.bf16.mxu0 %v382
    %496 = vmatpush1.bf16.msra.mxu0 %v381
    %497 = vmatprep.subr.bf16.mxu0 %v386
    %498 = vmatpush1.bf16.msra.mxu0 %v385
    %499 = vmatprep.subr.bf16.mxu0 %v390
    %500 = vmatpush1.bf16.msra.mxu0 %v389
    %501 = vmatprep.subr.bf16.mxu0 %v394
    %502 = vmatpush1.bf16.msra.mxu0 %v393
    %503 = vmatprep.subr.bf16.mxu0 %v398
    %504 = vmatpush1.bf16.msra.mxu0 %v397
    %505 = vmatprep.subr.bf16.mxu0 %v402
    %506 = vmatpush1.bf16.msra.mxu0 %v401
    %507 = vmatprep.subr.bf16.mxu0 %v406
    %508 = vmatpush1.bf16.msra.mxu0 %v405
    %509 = vmatprep.subr.bf16.mxu0 %v410
    %510 = vmatpush1.bf16.msra.mxu0 %v409
    %511 = vmatprep.subr.bf16.mxu0 %v414
    %512 = vmatpush1.bf16.msra.mxu0 %v413
    %513 = vmatprep.mubr.bf16.mxu0 %v88
    %514 = vmatmul.mubr.bf16.gmra.mrb[0].mxu0 %v87
    %v515 = vpop.f32.mrb[0].mxu0
    %v516 = vadd.f32 %v153, %v515
    %v517 = vpop.f32.mrb[0].mxu0
    %v518 = vadd.f32 %v154, %v517
    %v519 = vpop.f32.mrb[0].mxu0
    %v520 = vadd.f32 %v157, %v519
    %v521 = vpop.f32.mrb[0].mxu0
    %v522 = vadd.f32 %v158, %v521
    %523 = vdwg.mxu0
    %524 = vmatprep.subr.bf16.mxu0 %v356
    %525 = vmatpush1.bf16.msra.mxu0 %v355
    %526 = vmatprep.subr.bf16.mxu0 %v360
    %527 = vmatpush1.bf16.msra.mxu0 %v359
    %528 = vmatprep.subr.bf16.mxu0 %v364
    %529 = vmatpush1.bf16.msra.mxu0 %v363
    %530 = vmatprep.subr.bf16.mxu0 %v368
    %531 = vmatpush1.bf16.msra.mxu0 %v367
    %532 = vmatprep.subr.bf16.mxu0 %v372
    %533 = vmatpush1.bf16.msra.mxu0 %v371
    %534 = vmatprep.subr.bf16.mxu0 %v376
    %535 = vmatpush1.bf16.msra.mxu0 %v375
    %536 = vmatprep.subr.bf16.mxu0 %v380
    %537 = vmatpush1.bf16.msra.mxu0 %v379
    %538 = vmatprep.subr.bf16.mxu0 %v384
    %539 = vmatpush1.bf16.msra.mxu0 %v383
    %540 = vmatprep.subr.bf16.mxu0 %v388
    %541 = vmatpush1.bf16.msra.mxu0 %v387
    %542 = vmatprep.subr.bf16.mxu0 %v392
    %543 = vmatpush1.bf16.msra.mxu0 %v391
    %544 = vmatprep.subr.bf16.mxu0 %v396
    %545 = vmatpush1.bf16.msra.mxu0 %v395
    %546 = vmatprep.subr.bf16.mxu0 %v400
    %547 = vmatpush1.bf16.msra.mxu0 %v399
    %548 = vmatprep.subr.bf16.mxu0 %v404
    %549 = vmatpush1.bf16.msra.mxu0 %v403
    %550 = vmatprep.subr.bf16.mxu0 %v408
    %551 = vmatpush1.bf16.msra.mxu0 %v407
    %552 = vmatprep.subr.bf16.mxu0 %v412
    %553 = vmatpush1.bf16.msra.mxu0 %v411
    %554 = vmatprep.subr.bf16.mxu0 %v416
    %555 = vmatpush1.bf16.msra.mxu0 %v415
    %556 = vmatprep.mubr.bf16.mxu0 %v88
    %557 = vmatmul.mubr.bf16.gmra.mrb[0].mxu0 %v87
    %v558 = vpop.f32.mrb[0].mxu0
    %v559 = vadd.f32 %v155, %v558
    %v560 = vpop.f32.mrb[0].mxu0
    %v561 = vadd.f32 %v156, %v560
    %v562 = vpop.f32.mrb[0].mxu0
    %v563 = vadd.f32 %v159, %v562
    %v564 = vpop.f32.mrb[0].mxu0
    %v565 = vadd.f32 %v160, %v564
    %566 = vdwg.mxu0
    %v567 = vmul.f32 %v516, 0.2
    %v568 = vmul.f32 %v518, 0.2
    %v569 = vmul.f32 %v559, 0.2
    %v570 = vmul.f32 %v561, 0.2
    %v571 = vmul.f32 %v520, 0.2
    %v572 = vmul.f32 %v522, 0.2
    %v573 = vmul.f32 %v563, 0.2
    %v574 = vmul.f32 %v565, 0.2
    %v575 = vmax.f32 %v516, %v567
    %v576 = vmax.f32 %v518, %v568
    %v577 = vmax.f32 %v559, %v569
    %v578 = vmax.f32 %v561, %v570
    %v579 = vmax.f32 %v520, %v571
    %v580 = vmax.f32 %v522, %v572
    %v581 = vmax.f32 %v563, %v573
    %v582 = vmax.f32 %v565, %v574
    %v583 = vpack.c.bf16 %v579, %v575
    %v584 = vpack.c.bf16 %v580, %v576
    %v585 = vpack.c.bf16 %v581, %v577
    %v586 = vpack.c.bf16 %v582, %v578
    %v587 = vld [vmem:[#allocation8] sm:$0xff]
    %v588 = vld [vmem:[#allocation8 + $0x8] sm:$0xff]
    %v589 = vld [vmem:[#allocation8 + $0x10] sm:$0xff]
    %v590 = vld [vmem:[#allocation8 + $0x18] sm:$0xff]
    %v591 = vld [vmem:[#allocation8 + $0x20] sm:$0xff]
    %v592 = vld [vmem:[#allocation8 + $0x28] sm:$0xff]
    %v593 = vld [vmem:[#allocation8 + $0x30] sm:$0xff]
    %v594 = vld [vmem:[#allocation8 + $0x38] sm:$0xff]
    %v595 = vld [vmem:[#allocation8 + $0x40] sm:$0xff]
    %v596 = vld [vmem:[#allocation8 + $0x48] sm:$0xff]
    %v597 = vld [vmem:[#allocation8 + $0x50] sm:$0xff]
    %v598 = vld [vmem:[#allocation8 + $0x58] sm:$0xff]
    %v599 = vld [vmem:[#allocation8 + $0x60] sm:$0xff]
    %v600 = vld [vmem:[#allocation8 + $0x68] sm:$0xff]
    %v601 = vld [vmem:[#allocation8 + $0x70] sm:$0xff]
    %v602 = vld [vmem:[#allocation8 + $0x78] sm:$0xff]
    %v603 = vld [vmem:[#allocation8 + $0x80] sm:$0xff]
    %v604 = vld [vmem:[#allocation8 + $0x88] sm:$0xff]
    %v605 = vld [vmem:[#allocation8 + $0x90] sm:$0xff]
    %v606 = vld [vmem:[#allocation8 + $0x98] sm:$0xff]
    %v607 = vld [vmem:[#allocation8 + $0xa0] sm:$0xff]
    %v608 = vld [vmem:[#allocation8 + $0xa8] sm:$0xff]
    %v609 = vld [vmem:[#allocation8 + $0xb0] sm:$0xff]
    %v610 = vld [vmem:[#allocation8 + $0xb8] sm:$0xff]
    %v611 = vld [vmem:[#allocation8 + $0xc0] sm:$0xff]
    %v612 = vld [vmem:[#allocation8 + $0xc8] sm:$0xff]
    %v613 = vld [vmem:[#allocation8 + $0xd0] sm:$0xff]
    %v614 = vld [vmem:[#allocation8 + $0xd8] sm:$0xff]
    %v615 = vld [vmem:[#allocation8 + $0xe0] sm:$0xff]
    %v616 = vld [vmem:[#allocation8 + $0xe8] sm:$0xff]
    %v617 = vld [vmem:[#allocation8 + $0xf0] sm:$0xff]
    %v618 = vld [vmem:[#allocation8 + $0xf8] sm:$0xff]
    %v619 = vld [vmem:[#allocation8 + $0x100] sm:$0xff]
    %v620 = vld [vmem:[#allocation8 + $0x108] sm:$0xff]
    %v621 = vld [vmem:[#allocation8 + $0x110] sm:$0xff]
    %v622 = vld [vmem:[#allocation8 + $0x118] sm:$0xff]
    %v623 = vld [vmem:[#allocation8 + $0x120] sm:$0xff]
    %v624 = vld [vmem:[#allocation8 + $0x128] sm:$0xff]
    %v625 = vld [vmem:[#allocation8 + $0x130] sm:$0xff]
    %v626 = vld [vmem:[#allocation8 + $0x138] sm:$0xff]
    %v627 = vld [vmem:[#allocation8 + $0x140] sm:$0xff]
    %v628 = vld [vmem:[#allocation8 + $0x148] sm:$0xff]
    %v629 = vld [vmem:[#allocation8 + $0x150] sm:$0xff]
    %v630 = vld [vmem:[#allocation8 + $0x158] sm:$0xff]
    %v631 = vld [vmem:[#allocation8 + $0x160] sm:$0xff]
    %v632 = vld [vmem:[#allocation8 + $0x168] sm:$0xff]
    %v633 = vld [vmem:[#allocation8 + $0x170] sm:$0xff]
    %v634 = vld [vmem:[#allocation8 + $0x178] sm:$0xff]
    %v635 = vld [vmem:[#allocation8 + $0x180] sm:$0xff]
    %v636 = vld [vmem:[#allocation8 + $0x188] sm:$0xff]
    %v637 = vld [vmem:[#allocation8 + $0x190] sm:$0xff]
    %v638 = vld [vmem:[#allocation8 + $0x198] sm:$0xff]
    %v639 = vld [vmem:[#allocation8 + $0x1a0] sm:$0xff]
    %v640 = vld [vmem:[#allocation8 + $0x1a8] sm:$0xff]
    %v641 = vld [vmem:[#allocation8 + $0x1b0] sm:$0xff]
    %v642 = vld [vmem:[#allocation8 + $0x1b8] sm:$0xff]
    %v643 = vld [vmem:[#allocation8 + $0x1c0] sm:$0xff]
    %v644 = vld [vmem:[#allocation8 + $0x1c8] sm:$0xff]
    %v645 = vld [vmem:[#allocation8 + $0x1d0] sm:$0xff]
    %v646 = vld [vmem:[#allocation8 + $0x1d8] sm:$0xff]
    %v647 = vld [vmem:[#allocation8 + $0x1e0] sm:$0xff]
    %v648 = vld [vmem:[#allocation8 + $0x1e8] sm:$0xff]
    %v649 = vld [vmem:[#allocation8 + $0x1f0] sm:$0xff]
    %v650 = vld [vmem:[#allocation8 + $0x1f8] sm:$0xff]
    %v651 = vld [vmem:[%s4] sm:$0x3]
    %v653 = vlaneseq
    %v654 = vshrl.u32 %v653, 7
    %v655 = vsub.s32 0, %v654
    %v656 = vrot.slane %v651, %v655
    %v657 = vlaneseq
    %v658 = vshrl.u32 %v657, 7
    %v659 = vsub.s32 1, %v658
    %v660 = vrot.slane %v651, %v659
    %v727 = vunpack.c.l.b16 %v587
    %v728 = vunpack.c.h.b16 %v587
    %v729 = vunpack.c.l.b16 %v588
    %v730 = vunpack.c.h.b16 %v588
    %v731 = vunpack.c.l.b16 %v589
    %v732 = vunpack.c.h.b16 %v589
    %v733 = vunpack.c.l.b16 %v590
    %v734 = vunpack.c.h.b16 %v590
    %v735 = vunpack.c.l.b16 %v591
    %v736 = vunpack.c.h.b16 %v591
    %v737 = vunpack.c.l.b16 %v592
    %v738 = vunpack.c.h.b16 %v592
    %v739 = vunpack.c.l.b16 %v593
    %v740 = vunpack.c.h.b16 %v593
    %v741 = vunpack.c.l.b16 %v594
    %v742 = vunpack.c.h.b16 %v594
    %v743 = vunpack.c.l.b16 %v595
    %v744 = vunpack.c.h.b16 %v595
    %v745 = vunpack.c.l.b16 %v596
    %v746 = vunpack.c.h.b16 %v596
    %v747 = vunpack.c.l.b16 %v597
    %v748 = vunpack.c.h.b16 %v597
    %v749 = vunpack.c.l.b16 %v598
    %v750 = vunpack.c.h.b16 %v598
    %v751 = vunpack.c.l.b16 %v599
    %v752 = vunpack.c.h.b16 %v599
    %v753 = vunpack.c.l.b16 %v600
    %v754 = vunpack.c.h.b16 %v600
    %v755 = vunpack.c.l.b16 %v601
    %v756 = vunpack.c.h.b16 %v601
    %v757 = vunpack.c.l.b16 %v602
    %v758 = vunpack.c.h.b16 %v602
    %v759 = vunpack.c.l.b16 %v603
    %v760 = vunpack.c.h.b16 %v603
    %v761 = vunpack.c.l.b16 %v604
    %v762 = vunpack.c.h.b16 %v604
    %v763 = vunpack.c.l.b16 %v605
    %v764 = vunpack.c.h.b16 %v605
    %v765 = vunpack.c.l.b16 %v606
    %v766 = vunpack.c.h.b16 %v606
    %v767 = vunpack.c.l.b16 %v607
    %v768 = vunpack.c.h.b16 %v607
    %v769 = vunpack.c.l.b16 %v608
    %v770 = vunpack.c.h.b16 %v608
    %v771 = vunpack.c.l.b16 %v609
    %v772 = vunpack.c.h.b16 %v609
    %v773 = vunpack.c.l.b16 %v610
    %v774 = vunpack.c.h.b16 %v610
    %v775 = vunpack.c.l.b16 %v611
    %v776 = vunpack.c.h.b16 %v611
    %v777 = vunpack.c.l.b16 %v612
    %v778 = vunpack.c.h.b16 %v612
    %v779 = vunpack.c.l.b16 %v613
    %v780 = vunpack.c.h.b16 %v613
    %v781 = vunpack.c.l.b16 %v614
    %v782 = vunpack.c.h.b16 %v614
    %v783 = vunpack.c.l.b16 %v615
    %v784 = vunpack.c.h.b16 %v615
    %v785 = vunpack.c.l.b16 %v616
    %v786 = vunpack.c.h.b16 %v616
    %v787 = vunpack.c.l.b16 %v617
    %v788 = vunpack.c.h.b16 %v617
    %v789 = vunpack.c.l.b16 %v618
    %v790 = vunpack.c.h.b16 %v618
    %v791 = vunpack.c.l.b16 %v619
    %v792 = vunpack.c.h.b16 %v619
    %v793 = vunpack.c.l.b16 %v620
    %v794 = vunpack.c.h.b16 %v620
    %v795 = vunpack.c.l.b16 %v621
    %v796 = vunpack.c.h.b16 %v621
    %v797 = vunpack.c.l.b16 %v622
    %v798 = vunpack.c.h.b16 %v622
    %v799 = vunpack.c.l.b16 %v623
    %v800 = vunpack.c.h.b16 %v623
    %v801 = vunpack.c.l.b16 %v624
    %v802 = vunpack.c.h.b16 %v624
    %v803 = vunpack.c.l.b16 %v625
    %v804 = vunpack.c.h.b16 %v625
    %v805 = vunpack.c.l.b16 %v626
    %v806 = vunpack.c.h.b16 %v626
    %v807 = vunpack.c.l.b16 %v627
    %v808 = vunpack.c.h.b16 %v627
    %v809 = vunpack.c.l.b16 %v628
    %v810 = vunpack.c.h.b16 %v628
    %v811 = vunpack.c.l.b16 %v629
    %v812 = vunpack.c.h.b16 %v629
    %v813 = vunpack.c.l.b16 %v630
    %v814 = vunpack.c.h.b16 %v630
    %v815 = vunpack.c.l.b16 %v631
    %v816 = vunpack.c.h.b16 %v631
    %v817 = vunpack.c.l.b16 %v632
    %v818 = vunpack.c.h.b16 %v632
    %v819 = vunpack.c.l.b16 %v633
    %v820 = vunpack.c.h.b16 %v633
    %v821 = vunpack.c.l.b16 %v634
    %v822 = vunpack.c.h.b16 %v634
    %v823 = vunpack.c.l.b16 %v635
    %v824 = vunpack.c.h.b16 %v635
    %v825 = vunpack.c.l.b16 %v636
    %v826 = vunpack.c.h.b16 %v636
    %v827 = vunpack.c.l.b16 %v637
    %v828 = vunpack.c.h.b16 %v637
    %v829 = vunpack.c.l.b16 %v638
    %v830 = vunpack.c.h.b16 %v638
    %v831 = vunpack.c.l.b16 %v639
    %v832 = vunpack.c.h.b16 %v639
    %v833 = vunpack.c.l.b16 %v640
    %v834 = vunpack.c.h.b16 %v640
    %v835 = vunpack.c.l.b16 %v641
    %v836 = vunpack.c.h.b16 %v641
    %v837 = vunpack.c.l.b16 %v642
    %v838 = vunpack.c.h.b16 %v642
    %v839 = vunpack.c.l.b16 %v643
    %v840 = vunpack.c.h.b16 %v643
    %v841 = vunpack.c.l.b16 %v644
    %v842 = vunpack.c.h.b16 %v644
    %v843 = vunpack.c.l.b16 %v645
    %v844 = vunpack.c.h.b16 %v645
    %v845 = vunpack.c.l.b16 %v646
    %v846 = vunpack.c.h.b16 %v646
    %v847 = vunpack.c.l.b16 %v647
    %v848 = vunpack.c.h.b16 %v647
    %v849 = vunpack.c.l.b16 %v648
    %v850 = vunpack.c.h.b16 %v648
    %v851 = vunpack.c.l.b16 %v649
    %v852 = vunpack.c.h.b16 %v649
    %v853 = vunpack.c.l.b16 %v650
    %v854 = vunpack.c.h.b16 %v650
    %v855 = vpack.c.b16 %v729, %v727
    %v856 = vpack.c.b16 %v730, %v728
    %v857 = vpack.c.b16 %v733, %v731
    %v858 = vpack.c.b16 %v734, %v732
    %v859 = vpack.c.b16 %v737, %v735
    %v860 = vpack.c.b16 %v738, %v736
    %v861 = vpack.c.b16 %v741, %v739
    %v862 = vpack.c.b16 %v742, %v740
    %v863 = vpack.c.b16 %v745, %v743
    %v864 = vpack.c.b16 %v746, %v744
    %v865 = vpack.c.b16 %v749, %v747
    %v866 = vpack.c.b16 %v750, %v748
    %v867 = vpack.c.b16 %v753, %v751
    %v868 = vpack.c.b16 %v754, %v752
    %v869 = vpack.c.b16 %v757, %v755
    %v870 = vpack.c.b16 %v758, %v756
    %v871 = vpack.c.b16 %v761, %v759
    %v872 = vpack.c.b16 %v762, %v760
    %v873 = vpack.c.b16 %v765, %v763
    %v874 = vpack.c.b16 %v766, %v764
    %v875 = vpack.c.b16 %v769, %v767
    %v876 = vpack.c.b16 %v770, %v768
    %v877 = vpack.c.b16 %v773, %v771
    %v878 = vpack.c.b16 %v774, %v772
    %v879 = vpack.c.b16 %v777, %v775
    %v880 = vpack.c.b16 %v778, %v776
    %v881 = vpack.c.b16 %v781, %v779
    %v882 = vpack.c.b16 %v782, %v780
    %v883 = vpack.c.b16 %v785, %v783
    %v884 = vpack.c.b16 %v786, %v784
    %v885 = vpack.c.b16 %v789, %v787
    %v886 = vpack.c.b16 %v790, %v788
    %v887 = vpack.c.b16 %v793, %v791
    %v888 = vpack.c.b16 %v794, %v792
    %v889 = vpack.c.b16 %v797, %v795
    %v890 = vpack.c.b16 %v798, %v796
    %v891 = vpack.c.b16 %v801, %v799
    %v892 = vpack.c.b16 %v802, %v800
    %v893 = vpack.c.b16 %v805, %v803
    %v894 = vpack.c.b16 %v806, %v804
    %v895 = vpack.c.b16 %v809, %v807
    %v896 = vpack.c.b16 %v810, %v808
    %v897 = vpack.c.b16 %v813, %v811
    %v898 = vpack.c.b16 %v814, %v812
    %v899 = vpack.c.b16 %v817, %v815
    %v900 = vpack.c.b16 %v818, %v816
    %v901 = vpack.c.b16 %v821, %v819
    %v902 = vpack.c.b16 %v822, %v820
    %v903 = vpack.c.b16 %v825, %v823
    %v904 = vpack.c.b16 %v826, %v824
    %v905 = vpack.c.b16 %v829, %v827
    %v906 = vpack.c.b16 %v830, %v828
    %v907 = vpack.c.b16 %v833, %v831
    %v908 = vpack.c.b16 %v834, %v832
    %v909 = vpack.c.b16 %v837, %v835
    %v910 = vpack.c.b16 %v838, %v836
    %v911 = vpack.c.b16 %v841, %v839
    %v912 = vpack.c.b16 %v842, %v840
    %v913 = vpack.c.b16 %v845, %v843
    %v914 = vpack.c.b16 %v846, %v844
    %v915 = vpack.c.b16 %v849, %v847
    %v916 = vpack.c.b16 %v850, %v848
    %v917 = vpack.c.b16 %v853, %v851
    %v918 = vpack.c.b16 %v854, %v852
    %983 = vmatprep.subr.bf16.mxu0 %v856
    %984 = vmatpush1.bf16.msra.mxu0 %v855
    %985 = vmatprep.subr.bf16.mxu0 %v858
    %986 = vmatpush1.bf16.msra.mxu0 %v857
    %987 = vmatprep.subr.bf16.mxu0 %v860
    %988 = vmatpush1.bf16.msra.mxu0 %v859
    %989 = vmatprep.subr.bf16.mxu0 %v862
    %990 = vmatpush1.bf16.msra.mxu0 %v861
    %991 = vmatprep.subr.bf16.mxu0 %v864
    %992 = vmatpush1.bf16.msra.mxu0 %v863
    %993 = vmatprep.subr.bf16.mxu0 %v866
    %994 = vmatpush1.bf16.msra.mxu0 %v865
    %995 = vmatprep.subr.bf16.mxu0 %v868
    %996 = vmatpush1.bf16.msra.mxu0 %v867
    %997 = vmatprep.subr.bf16.mxu0 %v870
    %998 = vmatpush1.bf16.msra.mxu0 %v869
    %999 = vmatprep.subr.bf16.mxu0 %v872
    %1000 = vmatpush1.bf16.msra.mxu0 %v871
    %1001 = vmatprep.subr.bf16.mxu0 %v874
    %1002 = vmatpush1.bf16.msra.mxu0 %v873
    %1003 = vmatprep.subr.bf16.mxu0 %v876
    %1004 = vmatpush1.bf16.msra.mxu0 %v875
    %1005 = vmatprep.subr.bf16.mxu0 %v878
    %1006 = vmatpush1.bf16.msra.mxu0 %v877
    %1007 = vmatprep.subr.bf16.mxu0 %v880
    %1008 = vmatpush1.bf16.msra.mxu0 %v879
    %1009 = vmatprep.subr.bf16.mxu0 %v882
    %1010 = vmatpush1.bf16.msra.mxu0 %v881
    %1011 = vmatprep.subr.bf16.mxu0 %v884
    %1012 = vmatpush1.bf16.msra.mxu0 %v883
    %1013 = vmatprep.subr.bf16.mxu0 %v886
    %1014 = vmatpush1.bf16.msra.mxu0 %v885
    %1015 = vmatprep.mubr.bf16.mxu0 %v584
    %1016 = vmatmul.mubr.bf16.gmra.mrb[0].mxu0 %v583
    %v1017 = vpop.f32.mrb[0].mxu0
    %v1018 = vadd.f32 %v656, %v1017
    %v1019 = vpop.f32.mrb[0].mxu0
    %v1020 = vadd.f32 %v660, %v1019
    %v1021 = vpop.f32.mrb[0].mxu0
    %v1022 = vadd.f32 %v656, %v1021
    %v1023 = vpop.f32.mrb[0].mxu0
    %v1024 = vadd.f32 %v660, %v1023
    %1025 = vdwg.mxu0
    %1026 = vmatprep.subr.bf16.mxu0 %v888
    %1027 = vmatpush1.bf16.msra.mxu0 %v887
    %1028 = vmatprep.subr.bf16.mxu0 %v890
    %1029 = vmatpush1.bf16.msra.mxu0 %v889
    %1030 = vmatprep.subr.bf16.mxu0 %v892
    %1031 = vmatpush1.bf16.msra.mxu0 %v891
    %1032 = vmatprep.subr.bf16.mxu0 %v894
    %1033 = vmatpush1.bf16.msra.mxu0 %v893
    %1034 = vmatprep.subr.bf16.mxu0 %v896
    %1035 = vmatpush1.bf16.msra.mxu0 %v895
    %1036 = vmatprep.subr.bf16.mxu0 %v898
    %1037 = vmatpush1.bf16.msra.mxu0 %v897
    %1038 = vmatprep.subr.bf16.mxu0 %v900
    %1039 = vmatpush1.bf16.msra.mxu0 %v899
    %1040 = vmatprep.subr.bf16.mxu0 %v902
    %1041 = vmatpush1.bf16.msra.mxu0 %v901
    %1042 = vmatprep.subr.bf16.mxu0 %v904
    %1043 = vmatpush1.bf16.msra.mxu0 %v903
    %1044 = vmatprep.subr.bf16.mxu0 %v906
    %1045 = vmatpush1.bf16.msra.mxu0 %v905
    %1046 = vmatprep.subr.bf16.mxu0 %v908
    %1047 = vmatpush1.bf16.msra.mxu0 %v907
    %1048 = vmatprep.subr.bf16.mxu0 %v910
    %1049 = vmatpush1.bf16.msra.mxu0 %v909
    %1050 = vmatprep.subr.bf16.mxu0 %v912
    %1051 = vmatpush1.bf16.msra.mxu0 %v911
    %1052 = vmatprep.subr.bf16.mxu0 %v914
    %1053 = vmatpush1.bf16.msra.mxu0 %v913
    %1054 = vmatprep.subr.bf16.mxu0 %v916
    %1055 = vmatpush1.bf16.msra.mxu0 %v915
    %1056 = vmatprep.subr.bf16.mxu0 %v918
    %1057 = vmatpush1.bf16.msra.mxu0 %v917
    %1058 = vmatprep.mubr.bf16.mxu0 %v586
    %1059 = vmatmul.mubr.bf16.gmra.mrb[0].mxu0 %v585
    %v1060 = vpop.f32.mrb[0].mxu0
    %v1061 = vadd.f32 %v1018, %v1060
    %v1062 = vpop.f32.mrb[0].mxu0
    %v1063 = vadd.f32 %v1020, %v1062
    %v1064 = vpop.f32.mrb[0].mxu0
    %v1065 = vadd.f32 %v1022, %v1064
    %v1066 = vpop.f32.mrb[0].mxu0
    %v1067 = vadd.f32 %v1024, %v1066
    %1068 = vdwg.mxu0
    %v1069 = vmul.f32 %v1061, 0.2
    %v1070 = vmul.f32 %v1063, 0.2
    %v1071 = vmul.f32 %v1065, 0.2
    %v1072 = vmul.f32 %v1067, 0.2
    %v1073 = vmax.f32 %v1061, %v1069
    %v1074 = vmax.f32 %v1063, %v1070
    %v1075 = vmax.f32 %v1065, %v1071
    %v1076 = vmax.f32 %v1067, %v1072
    %v1077 = vld [vmem:[%s5] sm:$0x3]
    %v1079 = vlaneseq
    %v1080 = vshrl.u32 %v1079, 7
    %v1081 = vsub.s32 0, %v1080
    %v1082 = vrot.slane %v1077, %v1081
    %v1083 = vlaneseq
    %v1084 = vshrl.u32 %v1083, 7
    %v1085 = vsub.s32 1, %v1084
    %v1086 = vrot.slane %v1077, %v1085
    %v1089 = vmul.f32 %v1073, %v1082
    %v1090 = vmul.f32 %v1074, %v1086
    %v1091 = vmul.f32 %v1075, %v1082
    %v1092 = vmul.f32 %v1076, %v1086
    %v1093 = vadd.f32 %v1089, %v1090
    %1094 = vadd.xlane.f32.xlu0 %v1093
    %v1095 = vpop.xlane.xlu0 %1094
    %v1096 = vadd.f32 %v1091, %v1092
    %1097 = vadd.xlane.f32.xlu0 %v1096
    %v1098 = vpop.xlane.xlu0 %1097
    %v1099 = vld [vmem:[#allocation2] sm:$0x1]
    %v1101 = vlaneseq
    %v1102 = vshrl.u32 %v1101, 7
    %v1103 = vsub.s32 0, %v1102
    %v1104 = vrot.slane %v1099, %v1103
    %v1106 = vadd.f32 %v1095, %v1104
    %v1107 = vadd.f32 %v1098, %v1104
    %v1108 = vsub.f32 0.0, %v1106
    %v1109 = vsub.f32 0.0, %v1107
    %v1110 = vmul.f32 %v1108, 1.442695
    %v1111 = vpow.pop %v1110
    %v1112 = vmul.f32 %v1109, 1.442695
    %v1113 = vpow.pop %v1112
    %v1114 = vadd.f32 %v1111, 1.0
    %v1115 = vadd.f32 %v1113, 1.0
    %v1116 = vrcp.pop %v1114
    %v1117 = vmul.f32 1.0, %v1116
    %v1118 = vrcp.pop %v1115
    %v1119 = vmul.f32 1.0, %v1118
    %vm1120 = vcmask 7168
    %1121 = vst.msk [vmem:[%s7] sm:$0xff] %vm1120, %v1117
    %1122 = vst.msk [vmem:[%s7 + $0x8] sm:$0xff] %vm1120, %v1119
    // Predicated region
    $region46: #{tpu_custom_call.1} parent=1 // pred_check
      _
    $region47: #{tpu_custom_call.1} parent=1 // pred_check_branch
      %1124 = sbr.rel (0) target = $region49
    $region48: #{tpu_custom_call.1} parent=1 // pred_region
      _
    $region49: #{tpu_custom_call.1} parent=1 // pred_fallthru
      _
    // Predicated region
    $region50: #{tpu_custom_call.1} parent=1 // pred_check
      _
    $region51: #{tpu_custom_call.1} parent=1 // pred_check_branch
      %1126 = sbr.rel (0) target = $region53
    $region52: #{tpu_custom_call.1} parent=1 // pred_region
      _
    $region53: #{tpu_custom_call.1} parent=1 // pred_fallthru
      _
    %1127 = vsyncpa [#allocation4], 1
    %1128 = vsyncpa [#allocation6], 1
    %1129 = vsyncpa [#allocation9], 1

</llo_original>
